<compile_context>
chip_gen: v7x
topology: tpu7x:2x2x1
jax: 0.10.0
libtpu: 0.0.40
codegen_flags: <defaults>
</compile_context>

<pallas_src>
import functools

import jax
import jax.numpy as jnp
from jax.experimental import pallas as pl
from jax.experimental.pallas import tpu as pltpu

LANE = 128
SUB = 8
MAX_TILE_ROWS = 2048  # 2048 * 128 * 4B = 1 MiB per f32 input buffer


def _sqdiff_partial_kernel(p_ref, t_ref, o_ref, *, rows, tile_rows, need_mask):
    """One grid step: (8, 128) partial sum of (p - t)^2 over its tile.

    p_ref / t_ref : (1, tile_rows, 128) native-dtype input tiles
    o_ref         : (1, 1, 8, 128) f32 partial-sum block (independent per step)
    """
    d = p_ref[0].astype(jnp.float32) - t_ref[0].astype(jnp.float32)
    dd = d * d
    if need_mask:
        # Last row-block may extend past the array; drop the garbage rows.
        i = pl.program_id(1)
        row_ids = jax.lax.broadcasted_iota(jnp.int32, (tile_rows, LANE), 0)
        row_ids = row_ids + i * tile_rows
        dd = jnp.where(row_ids < rows, dd, jnp.float32(0.0))
    # (tile_rows, 128) -> (tile_rows//8, 8, 128): pure sublane-group relabel,
    # reduced with plain vreg adds on the VPU (no cross-lane reduce per step).
    partial = jnp.sum(dd.reshape(tile_rows // SUB, SUB, LANE), axis=0)
    o_ref[0, 0] = partial


def batched_weighted_mse_pallas(preds, targets, weights,
                                max_tile_rows=MAX_TILE_ROWS):
    """errs[n] = weights[n] * mean((preds[n] - targets[n])**2), single launch.

    `preds` / `targets` are lists of same-shaped arrays (length >= 1).
    Returns an (N,) float32 vector of per-element errors.
    """
    N = len(preds)
    n = preds[0].size
    tile = SUB * LANE
    padded = ((n + tile - 1) // tile) * tile

    def prep(x):
        f = x.reshape(-1)  # native dtype; upcast happens per-tile in-kernel
        if padded != n:
            # Zero padding contributes nothing to the squared-diff sum.
            f = jnp.pad(f, (0, padded - n))
        return f.reshape(padded // LANE, LANE)

    rows = padded // LANE                      # multiple of 8 by construction
    if N == 1:
        ps = prep(preds[0])[None]
        ts = prep(targets[0])[None]
    else:
        ps = jnp.stack([prep(p) for p in preds])
        ts = jnp.stack([prep(t) for t in targets])

    tile_rows = min(max_tile_rows, rows)       # multiple of 8
    num_blocks = pl.cdiv(rows, tile_rows)
    need_mask = (rows % tile_rows) != 0

    kernel = functools.partial(
        _sqdiff_partial_kernel,
        rows=rows, tile_rows=tile_rows, need_mask=need_mask)

    partials = pl.pallas_call(
        kernel,
        out_shape=jax.ShapeDtypeStruct((N, num_blocks, SUB, LANE), jnp.float32),
        grid=(N, num_blocks),
        in_specs=[
            pl.BlockSpec((1, tile_rows, LANE), lambda b, i: (b, i, 0)),  # preds
            pl.BlockSpec((1, tile_rows, LANE), lambda b, i: (b, i, 0)),  # targets
        ],
        out_specs=pl.BlockSpec((1, 1, SUB, LANE), lambda b, i: (b, i, 0, 0)),
        compiler_params=pltpu.CompilerParams(
            dimension_semantics=("parallel", "parallel")),  # no cross-step dep
    )(ps, ts)

    sums = jnp.sum(partials, axis=(1, 2, 3))                       # (N,)
    w = jnp.asarray(weights, jnp.float32).reshape(-1)[:N]
    # TODO(synk): weight is applied as a scalar per list element (matching the
    # reference's weight[n]); full elementwise weight tensors not supported.
    return w * (sums * jnp.float32(1.0 / n))


def weighted_mse_pallas(pred, target, weight):
    """err = mean(weight * (pred - target)**2) for a single tensor pair."""
    w = jnp.asarray(weight, jnp.float32).reshape(-1)[:1]
    return batched_weighted_mse_pallas([pred], [target], w)[0]


class BaseLossPallas:
    """Mirrors BaseLoss.forward (list / tensor dispatch + optional weight)."""

    def __call__(self, preds, targets, weight=None):
        if isinstance(preds, (list, tuple)):
            N = len(preds)
            if weight is None:
                weight = jnp.ones((N,), jnp.float32)
            weight = jnp.asarray(weight, jnp.float32).reshape(-1)
            same = all(p.shape == preds[0].shape and p.dtype == preds[0].dtype
                       for p in preds)
            if same:
                errs = batched_weighted_mse_pallas(list(preds), list(targets),
                                                   weight[:N])
            else:
                errs = jnp.stack([self._forward(preds[n], targets[n],
                                                weight[n if weight.shape[0] > n else 0])
                                  for n in range(N)])
            return jnp.mean(errs)
        else:
            if weight is None:
                weight = jnp.ones((1,), jnp.float32)
            return self._forward(preds, targets, weight)

    def _forward(self, pred, target, weight):
        # TODO(synk): BaseLoss._forward is abstract in the PyTorch source; a
        # weighted MSE (standard L2 subclass) is used as the concrete error.
        return weighted_mse_pallas(pred, target, weight)


def _ref_wmse(pred, target, weight):
    w = jnp.asarray(weight, jnp.float32).reshape(-1)[0]
    d = pred.astype(jnp.float32) - target.astype(jnp.float32)
    return w * jnp.mean(d * d)


if __name__ == "__main__":
    key = jax.random.PRNGKey(0)
    k1, k2, k3, k4 = jax.random.split(key, 4)

    loss = BaseLossPallas()

    # ---- tensor path (no weight -> defaults to ones(1)) ----
    preds = jax.random.normal(k1, (2, 4, 16, 16), dtype=jnp.float32)
    targets = jax.random.normal(k2, (2, 4, 16, 16), dtype=jnp.float32)
    err_t = loss(preds, targets)
    jax.block_until_ready(err_t)
    ref_t = _ref_wmse(preds, targets, jnp.ones((1,), jnp.float32))
    assert jnp.allclose(err_t, ref_t, rtol=1e-5, atol=1e-6), (err_t, ref_t)

    # ---- list path with explicit per-element weights (fused single launch) ----
    preds_l = [preds, jax.random.normal(k3, (2, 4, 16, 16), dtype=jnp.float32)]
    targets_l = [targets, jax.random.normal(k4, (2, 4, 16, 16), dtype=jnp.float32)]
    weight = jnp.array([1.0, 0.5], dtype=jnp.float32)
    err_l = loss(preds_l, targets_l, weight)
    jax.block_until_ready(err_l)
    ref_l = jnp.mean(jnp.stack(
        [_ref_wmse(preds_l[i], targets_l[i], weight[i]) for i in range(2)]))
    assert jnp.allclose(err_l, ref_l, rtol=1e-5, atol=1e-6), (err_l, ref_l)

    # ---- non-divisible size exercising the zero-pad path ----
    big_p = jax.random.normal(k3, (3, 5, 37, 41), dtype=jnp.float32)
    big_t = jax.random.normal(k4, (3, 5, 37, 41), dtype=jnp.float32)
    err_b = loss(big_p, big_t)
    jax.block_until_ready(err_b)
    ref_b = _ref_wmse(big_p, big_t, jnp.ones((1,), jnp.float32))
    assert jnp.allclose(err_b, ref_b, rtol=1e-5, atol=1e-6), (err_b, ref_b)

    # ---- masked partial-tail path (small max_tile_rows forces rows % tile != 0)
    mp = jax.random.normal(k1, (2, 3, 24, 32), dtype=jnp.bfloat16)   # 4608 elems
    mt = jax.random.normal(k2, (2, 3, 24, 32), dtype=jnp.bfloat16)
    err_m = batched_weighted_mse_pallas([mp], [mt], jnp.ones((1,), jnp.float32),
                                        max_tile_rows=16)[0]
    jax.block_until_ready(err_m)
    ref_m = _ref_wmse(mp, mt, jnp.ones((1,), jnp.float32))
    assert jnp.allclose(err_m, ref_m, rtol=1e-2, atol=1e-3), (err_m, ref_m)

    print("KERNEL_OK")
</pallas_src>

<mosaic_0001>
module attributes {stable_mosaic.version = 11 : i64} {
  func.func @_sqdiff_partial_kernel(%arg0: i32, %arg1: i32, %arg2: memref<1x16x128xf32, #tpu.memory_space<vmem>>, %arg3: memref<1x16x128xf32, #tpu.memory_space<vmem>>, %arg4: memref<1x1x8x128xf32, #tpu.memory_space<vmem>>) attributes {dimension_semantics = [#tpu.dimension_semantics<parallel>, #tpu.dimension_semantics<parallel>], iteration_bounds = array<i64: 1, 1>, scalar_prefetch = 0 : i64, scratch_operands = 0 : i64, tpu.core_type = #tpu.core_type<tc>, window_params = [{transform_indices = @transform_0, window_bounds = array<i64: 1, 16, 128>}, {transform_indices = @transform_1, window_bounds = array<i64: 1, 16, 128>}, {transform_indices = @transform_2, window_bounds = array<i64: 1, 1, 8, 128>}]} {
    %c0 = arith.constant 0 : index
    %c0_0 = arith.constant 0 : index
    %c0_1 = arith.constant 0 : index
    %0 = vector.load %arg2[%c0, %c0_0, %c0_1] : memref<1x16x128xf32, #tpu.memory_space<vmem>>, vector<1x16x128xf32>
    %1 = vector.shape_cast %0 : vector<1x16x128xf32> to vector<16x128xf32>
    %c0_2 = arith.constant 0 : index
    %c0_3 = arith.constant 0 : index
    %c0_4 = arith.constant 0 : index
    %2 = vector.load %arg3[%c0_2, %c0_3, %c0_4] : memref<1x16x128xf32, #tpu.memory_space<vmem>>, vector<1x16x128xf32>
    %3 = vector.shape_cast %2 : vector<1x16x128xf32> to vector<16x128xf32>
    %4 = arith.subf %1, %3 : vector<16x128xf32>
    %5 = arith.mulf %4, %4 : vector<16x128xf32>
    %6 = vector.shape_cast %5 : vector<16x128xf32> to vector<2x8x128xf32>
    %cst = arith.constant dense<0.000000e+00> : vector<8x128xf32>
    %7 = vector.multi_reduction <add>, %6, %cst [0] : vector<2x8x128xf32> to vector<8x128xf32>
    %c0_5 = arith.constant 0 : index
    %c0_6 = arith.constant 0 : index
    %c0_7 = arith.constant 0 : index
    %c0_8 = arith.constant 0 : index
    %8 = vector.load %arg4[%c0_5, %c0_6, %c0_7, %c0_8] : memref<1x1x8x128xf32, #tpu.memory_space<vmem>>, vector<1x1x8x128xf32>
    %9 = vector.shape_cast %8 : vector<1x1x8x128xf32> to vector<8x128xf32>
    %10 = vector.shape_cast %7 : vector<8x128xf32> to vector<1x1x8x128xf32>
    tpu.vector_store %arg4[%c0_5, %c0_6, %c0_7, %c0_8], %10 {strides = array<i32>} : memref<1x1x8x128xf32, #tpu.memory_space<vmem>>, vector<1x1x8x128xf32>,
    return
  }
  func.func @transform_0(%arg0: i32, %arg1: i32) -> (i32, i32, i32) {
    %c0_i32 = arith.constant 0 : i32
    %c0_i32_0 = arith.constant 0 : i32
    return %arg0, %arg1, %c0_i32 : i32, i32, i32
  }
  func.func @transform_1(%arg0: i32, %arg1: i32) -> (i32, i32, i32) {
    %c0_i32 = arith.constant 0 : i32
    %c0_i32_0 = arith.constant 0 : i32
    return %arg0, %arg1, %c0_i32 : i32, i32, i32
  }
  func.func @transform_2(%arg0: i32, %arg1: i32) -> (i32, i32, i32, i32) {
    %c0_i32 = arith.constant 0 : i32
    %c0_i32_0 = arith.constant 0 : i32
    %c0_i32_1 = arith.constant 0 : i32
    return %arg0, %arg1, %c0_i32, %c0_i32_0 : i32, i32, i32, i32
  }
}

</mosaic_0001>

<llo_original>
// kernel: tpu_custom_call.1
$region0: #{tpu_custom_call.1}
  #allocation0 [shape = 'u32[]', space=smem, size = 0x4, offset = 0x4, fixed_abs, tag = 'smem constant byte address 0x4 - core index']
  #allocation1 [shape = 'u32[144,128]{1,0:T(1,128)}', space=vmem, size = 0x12000, scoped, tag = 'internal scratch']
  %s0 = inlined_call_operand.hbm [shape: f32[1,16,128], index: 0, kind: input, shape index: {}]
  %s1 = inlined_call_operand.hbm [shape: f32[1,16,128], index: 1, kind: input, shape index: {}]
  %s2 = inlined_call_operand.hbm [shape: f32[1,1,8,128], index: 2, kind: output, shape index: {}]
  %s3 = sld [smem:[#allocation0]]
  $region26: #{tpu_custom_call.1} parent=0
    _
  %s5 = ssub.s32 1, %s3
  %s6 = scalar_select 0, %s5, %s3
  $region1: #{tpu_custom_call.1} parent=0
    #allocation2 [shape = 'u8[8192]{0}', space=vmem, size = 0x2000, scoped, tag = 'input window, operand 0, single buffered']
    #allocation3 [shape = 's32[1]{0}', space=sflag, size = 0x4, scoped, tag = 'scoped memory for tpu_custom_call.1']
    #allocation4 [shape = 's32[1]{0}', space=sflag, size = 0x4, scoped, tag = 'scoped memory for tpu_custom_call.1']
    #allocation5 [shape = 'u8[8192]{0}', space=vmem, size = 0x2000, scoped, tag = 'input window, operand 1, single buffered']
    #allocation6 [shape = 's32[1]{0}', space=sflag, size = 0x4, scoped, tag = 'scoped memory for tpu_custom_call.1']
    #allocation7 [shape = 'u8[4096]{0}', space=vmem, size = 0x1000, scoped, tag = 'output window, operand 0, single buffered']
    %7 = vsyncpa [#allocation3], 0
    %8 = vsyncpa [#allocation6], 0
    %9 = vsyncpa [#allocation4], 0
    // Predicated region
    $region2: #{tpu_custom_call.1} parent=1 // pred_check
      _
    $region3: #{tpu_custom_call.1} parent=1 // pred_check_branch
      %11 = sbr.rel (0) target = $region5
    $region4: #{tpu_custom_call.1} parent=1 // pred_region
      %s13 = ssub.s32 256, 256
      %14 = vsyncadd [#allocation3], %s13
      %s15 = sshll.u32 [#allocation2], 4
      %s16 = int_to_ptr.vmem [resolvable:$true] %s15
      %21 = dma.hbm_to_vmem [thread:$0]  %s0, 256, %s16, [#allocation3], 128, 128, 8
    $region5: #{tpu_custom_call.1} parent=1 // pred_fallthru
      _
    // Predicated region
    $region6: #{tpu_custom_call.1} parent=1 // pred_check
      _
    $region7: #{tpu_custom_call.1} parent=1 // pred_check_branch
      %23 = sbr.rel (0) target = $region9
    $region8: #{tpu_custom_call.1} parent=1 // pred_region
      %s25 = ssub.s32 256, 256
      %26 = vsyncadd [#allocation6], %s25
      %s27 = sshll.u32 [#allocation5], 4
      %s28 = int_to_ptr.vmem [resolvable:$true] %s27
      %33 = dma.hbm_to_vmem [thread:$0]  %s1, 256, %s28, [#allocation6], 128, 128, 8
    $region9: #{tpu_custom_call.1} parent=1 // pred_fallthru
      _
    // Predicated region
    $region10: #{tpu_custom_call.1} parent=1 // pred_check
      _
    $region11: #{tpu_custom_call.1} parent=1 // pred_check_branch
      %35 = sbr.rel (0) target = $region13
    $region12: #{tpu_custom_call.1} parent=1 // pred_region
      %36 = dma.done [#allocation3], 256
    $region13: #{tpu_custom_call.1} parent=1 // pred_fallthru
      _
    // Predicated region
    $region14: #{tpu_custom_call.1} parent=1 // pred_check
      _
    $region15: #{tpu_custom_call.1} parent=1 // pred_check_branch
      %38 = sbr.rel (0) target = $region17
    $region16: #{tpu_custom_call.1} parent=1 // pred_region
      %39 = dma.done [#allocation6], 256
    $region17: #{tpu_custom_call.1} parent=1 // pred_fallthru
      _
    %v40 = vld [vmem:[#allocation2] sm:$0xff]
    %v41 = vld [vmem:[#allocation2 + $0x8] sm:$0xff]
    %v42 = vld [vmem:[#allocation5] sm:$0xff]
    %v43 = vld [vmem:[#allocation5 + $0x8] sm:$0xff]
    %v44 = vsub.f32 %v40, %v42
    %v45 = vsub.f32 %v41, %v43
    %v46 = vmul.f32 %v44, %v44
    %v47 = vmul.f32 %v45, %v45
    %v48 = vadd.f32 %v46, %v47
    %49 = vst [vmem:[#allocation7] sm:$0xff] %v48
    // Predicated region
    $region18: #{tpu_custom_call.1} parent=1 // pred_check
      _
    $region19: #{tpu_custom_call.1} parent=1 // pred_check_branch
      %51 = sbr.rel (0) target = $region21
    $region20: #{tpu_custom_call.1} parent=1 // pred_region
      %s53 = ssub.s32 128, 128
      %54 = vsyncadd [#allocation4], %s53
      %s56 = sshll.u32 [#allocation7], 4
      %s57 = int_to_ptr.vmem [resolvable:$true] %s56
      %59 = dma.vmem_to_hbm [thread:$0]  %s57, 128, %s2, [#allocation4]
    $region21: #{tpu_custom_call.1} parent=1 // pred_fallthru
      _
    // Predicated region
    $region22: #{tpu_custom_call.1} parent=1 // pred_check
      _
    $region23: #{tpu_custom_call.1} parent=1 // pred_check_branch
      %61 = sbr.rel (0) target = $region25
    $region24: #{tpu_custom_call.1} parent=1 // pred_region
      %62 = dma.done [#allocation4], 128
    $region25: #{tpu_custom_call.1} parent=1 // pred_fallthru
      _
    %63 = vsyncpa [#allocation3], 1
    %64 = vsyncpa [#allocation6], 1
    %65 = vsyncpa [#allocation4], 1

</llo_original>
